<compile_context>
chip_gen: v6e
topology: v6e:2x2x1
jax: 0.10.0
libtpu: 0.0.40
codegen_flags: <defaults>
</compile_context>

<pallas_src>
import functools

import jax
import jax.numpy as jnp
from jax.experimental import pallas as pl
from jax.experimental.pallas import tpu as pltpu

LANES = 128
SUBLANES = 8
TARGET_BLOCK_BYTES = 2 * 1024 * 1024  # per-input, per-step VMEM block


def _round_up(x, m):
    return ((x + m - 1) // m) * m


def _mse_partial_kernel(p_ref, t_ref, o_ref, *, row_tile, rows_total, need_mask):
    # Squared difference of one (row_tile, 128) block; accumulate into a
    # vreg-shaped (8, 128) partial by reducing over the leading axis only
    # (keeps lane/sublane positions fixed -> pure VPU adds, no XLU).
    d = p_ref[...].astype(jnp.float32) - t_ref[...].astype(jnp.float32)
    sq = d * d
    if need_mask:
        # Ragged last block: rows beyond the real array contain unspecified
        # data (Pallas partial-block padding); select 0 for them.  `where`
        # does not propagate NaNs from the unselected branch.
        row0 = pl.program_id(0) * row_tile
        row_ids = jax.lax.broadcasted_iota(jnp.int32, (row_tile, LANES), 0)
        sq = jnp.where(row_ids + row0 < rows_total, sq, 0.0)
    o_ref[...] = jnp.sum(sq.reshape(-1, SUBLANES, LANES), axis=0)


def mse_loss(preds, target):
    assert preds.shape == target.shape
    total = int(preds.size)
    itemsize = jnp.dtype(preds.dtype).itemsize

    p = preds.reshape(-1)
    t = target.reshape(-1)

    # Only pad up to the 128-lane width (edge case for sizes not divisible by
    # 128).  Zero padding is exact for MSE because we divide by the original
    # element count at the end.  No padding (and no copy) in the common case.
    padded_total = _round_up(total, LANES)
    if padded_total != total:
        pad = padded_total - total
        p = jnp.pad(p, (0, pad))
        t = jnp.pad(t, (0, pad))
    rows = padded_total // LANES
    p2 = p.reshape(rows, LANES)
    t2 = t.reshape(rows, LANES)

    # Row tile: biggest multiple of 8 whose per-input block stays within the
    # VMEM budget (2 MiB -> 4096 rows for f32, 8192 for bf16).
    max_rows = max(
        SUBLANES,
        (TARGET_BLOCK_BYTES // (LANES * itemsize)) // SUBLANES * SUBLANES,
    )
    row_tile = min(_round_up(rows, SUBLANES), max_rows)
    num_blocks = pl.cdiv(rows, row_tile)
    need_mask = (rows % row_tile) != 0  # static: masking compiled in only if ragged

    kernel = functools.partial(
        _mse_partial_kernel,
        row_tile=row_tile,
        rows_total=rows,
        need_mask=need_mask,
    )

    cost = pl.CostEstimate(
        flops=3 * padded_total,
        transcendentals=0,
        bytes_accessed=2 * padded_total * itemsize
        + num_blocks * SUBLANES * LANES * 4,
    )

    partials = pl.pallas_call(
        kernel,
        out_shape=jax.ShapeDtypeStruct(
            (num_blocks, SUBLANES, LANES), jnp.float32
        ),
        grid_spec=pltpu.PrefetchScalarGridSpec(
            num_scalar_prefetch=0,
            grid=(num_blocks,),
            in_specs=[
                pl.BlockSpec((row_tile, LANES), lambda i: (i, 0)),
                pl.BlockSpec((row_tile, LANES), lambda i: (i, 0)),
            ],
            out_specs=pl.BlockSpec((None, SUBLANES, LANES), lambda i: (i, 0, 0)),
        ),
        compiler_params=pltpu.CompilerParams(
            dimension_semantics=("parallel",),
            vmem_limit_bytes=32 * 1024 * 1024,
        ),
        cost_estimate=cost,
    )(p2, t2)

    # Tiny epilogue: one cross-lane reduce over (num_blocks, 8, 128) + divide.
    return jnp.sum(partials) / jnp.float32(total)


if __name__ == "__main__":
    key = jax.random.PRNGKey(0)
    kp, kt = jax.random.split(key)

    # Small 3-D volume consistent with the module's SSIM config
    # (channel=1, spatial_dims=3): N=2, C=1, D=8, H=16, W=16.
    shape = (2, 1, 8, 16, 16)
    preds = jax.random.uniform(kp, shape, dtype=jnp.float32)
    target = jax.random.uniform(kt, shape, dtype=jnp.float32)

    loss = mse_loss(preds, target)
    jax.block_until_ready(loss)
    ref = jnp.mean((preds - target) ** 2)
    assert jnp.allclose(loss, ref, rtol=1e-6, atol=1e-6), (loss, ref)

    # Exercise the ragged-block / padding path with an odd volume.
    shape_odd = (2, 1, 7, 9, 11)
    kp2, kt2 = jax.random.split(kt)
    p_odd = jax.random.uniform(kp2, shape_odd, dtype=jnp.float32)
    t_odd = jax.random.uniform(kt2, shape_odd, dtype=jnp.float32)
    loss_odd = mse_loss(p_odd, t_odd)
    jax.block_until_ready(loss_odd)
    ref_odd = jnp.mean((p_odd - t_odd) ** 2)
    assert jnp.allclose(loss_odd, ref_odd, rtol=1e-6, atol=1e-6), (
        loss_odd,
        ref_odd,
    )

    # Exercise the bf16 input path (cast to f32 inside the kernel).
    p_bf = preds.astype(jnp.bfloat16)
    t_bf = target.astype(jnp.bfloat16)
    loss_bf = mse_loss(p_bf, t_bf)
    jax.block_until_ready(loss_bf)
    ref_bf = jnp.mean(
        (p_bf.astype(jnp.float32) - t_bf.astype(jnp.float32)) ** 2
    )
    assert jnp.allclose(loss_bf, ref_bf, rtol=1e-3, atol=1e-3), (loss_bf, ref_bf)

    print("KERNEL_OK")
</pallas_src>

<mosaic_0001>
module attributes {stable_mosaic.version = 11 : i64} {
  func.func @_mse_partial_kernel(%arg0: i32, %arg1: memref<32x128xf32, #tpu.memory_space<vmem>>, %arg2: memref<32x128xf32, #tpu.memory_space<vmem>>, %arg3: memref<1x8x128xf32, #tpu.memory_space<vmem>>) attributes {dimension_semantics = [#tpu.dimension_semantics<parallel>], iteration_bounds = array<i64: 1>, scalar_prefetch = 0 : i64, scratch_operands = 0 : i64, tpu.core_type = #tpu.core_type<tc>, window_params = [{transform_indices = @transform_0, window_bounds = array<i64: 32, 128>}, {transform_indices = @transform_1, window_bounds = array<i64: 32, 128>}, {transform_indices = @transform_2, window_bounds = array<i64: 1, 8, 128>}]} {
    %c0 = arith.constant 0 : index
    %c0_0 = arith.constant 0 : index
    %0 = vector.load %arg1[%c0, %c0_0] : memref<32x128xf32, #tpu.memory_space<vmem>>, vector<32x128xf32>
    %c0_1 = arith.constant 0 : index
    %c0_2 = arith.constant 0 : index
    %1 = vector.load %arg2[%c0_1, %c0_2] : memref<32x128xf32, #tpu.memory_space<vmem>>, vector<32x128xf32>
    %2 = arith.subf %0, %1 : vector<32x128xf32>
    %3 = arith.mulf %2, %2 : vector<32x128xf32>
    %4 = vector.shape_cast %3 : vector<32x128xf32> to vector<4x8x128xf32>
    %cst = arith.constant dense<0.000000e+00> : vector<8x128xf32>
    %5 = vector.multi_reduction <add>, %4, %cst [0] : vector<4x8x128xf32> to vector<8x128xf32>
    %c0_3 = arith.constant 0 : index
    %c0_4 = arith.constant 0 : index
    %c0_5 = arith.constant 0 : index
    %6 = vector.load %arg3[%c0_3, %c0_4, %c0_5] : memref<1x8x128xf32, #tpu.memory_space<vmem>>, vector<1x8x128xf32>
    %7 = vector.shape_cast %6 : vector<1x8x128xf32> to vector<8x128xf32>
    %8 = vector.shape_cast %5 : vector<8x128xf32> to vector<1x8x128xf32>
    tpu.vector_store %arg3[%c0_3, %c0_4, %c0_5], %8 {strides = array<i32>} : memref<1x8x128xf32, #tpu.memory_space<vmem>>, vector<1x8x128xf32>,
    return
  }
  func.func @transform_0(%arg0: i32) -> (i32, i32) {
    %c0_i32 = arith.constant 0 : i32
    %c0_i32_0 = arith.constant 0 : i32
    return %arg0, %c0_i32 : i32, i32
  }
  func.func @transform_1(%arg0: i32) -> (i32, i32) {
    %c0_i32 = arith.constant 0 : i32
    %c0_i32_0 = arith.constant 0 : i32
    return %arg0, %c0_i32 : i32, i32
  }
  func.func @transform_2(%arg0: i32) -> (i32, i32, i32) {
    %c0_i32 = arith.constant 0 : i32
    %c0_i32_0 = arith.constant 0 : i32
    %c0_i32_1 = arith.constant 0 : i32
    return %arg0, %c0_i32, %c0_i32_0 : i32, i32, i32
  }
}

</mosaic_0001>

<llo_original>
// kernel: tpu_custom_call.1
$region0: #{tpu_custom_call.1}
  #allocation0 [shape = 'u32[]', space=smem, size = 0x4, offset = 0x4, fixed_abs, tag = 'smem constant byte address 0x4 - core index']
  #allocation1 [shape = 'u32[144,128]{1,0:T(1,128)}', space=vmem, size = 0x12000, scoped, tag = 'internal scratch']
  %s0 = inlined_call_operand.hbm [shape: f32[32,128], index: 0, kind: input, shape index: {}]
  %s1 = inlined_call_operand.hbm [shape: f32[32,128], index: 1, kind: input, shape index: {}]
  %s2 = inlined_call_operand.hbm [shape: f32[1,8,128], index: 2, kind: output, shape index: {}]
  %s3 = sld [smem:[#allocation0]]
  $region26: #{tpu_custom_call.1} parent=0
    _
  %s5 = ssub.s32 1, %s3
  %s6 = scalar_select 0, %s5, %s3
  $region1: #{tpu_custom_call.1} parent=0
    #allocation2 [shape = 'u8[16384]{0}', space=vmem, size = 0x4000, scoped, tag = 'input window, operand 0, single buffered']
    #allocation3 [shape = 's32[1]{0}', space=sflag, size = 0x4, scoped, tag = 'scoped memory for tpu_custom_call.1']
    #allocation4 [shape = 's32[1]{0}', space=sflag, size = 0x4, scoped, tag = 'scoped memory for tpu_custom_call.1']
    #allocation5 [shape = 'u8[16384]{0}', space=vmem, size = 0x4000, scoped, tag = 'input window, operand 1, single buffered']
    #allocation6 [shape = 's32[1]{0}', space=sflag, size = 0x4, scoped, tag = 'scoped memory for tpu_custom_call.1']
    #allocation7 [shape = 'u8[4096]{0}', space=vmem, size = 0x1000, scoped, tag = 'output window, operand 0, single buffered']
    %7 = vsyncpa [#allocation3], 0
    %8 = vsyncpa [#allocation6], 0
    %9 = vsyncpa [#allocation4], 0
    // Predicated region
    $region2: #{tpu_custom_call.1} parent=1 // pred_check
      _
    $region3: #{tpu_custom_call.1} parent=1 // pred_check_branch
      %11 = sbr.rel (0) target = $region5
    $region4: #{tpu_custom_call.1} parent=1 // pred_region
      %s13 = ssub.s32 512, 512
      %14 = vsyncadd [#allocation3], %s13
      %s15 = sshll.u32 [#allocation2], 4
      %s16 = int_to_ptr.vmem [resolvable:$true] %s15
      %21 = dma.hbm_to_vmem [thread:$0]  %s0, 512, %s16, [#allocation3], 128, 128, 8
    $region5: #{tpu_custom_call.1} parent=1 // pred_fallthru
      _
    // Predicated region
    $region6: #{tpu_custom_call.1} parent=1 // pred_check
      _
    $region7: #{tpu_custom_call.1} parent=1 // pred_check_branch
      %23 = sbr.rel (0) target = $region9
    $region8: #{tpu_custom_call.1} parent=1 // pred_region
      %s25 = ssub.s32 512, 512
      %26 = vsyncadd [#allocation6], %s25
      %s27 = sshll.u32 [#allocation5], 4
      %s28 = int_to_ptr.vmem [resolvable:$true] %s27
      %33 = dma.hbm_to_vmem [thread:$0]  %s1, 512, %s28, [#allocation6], 128, 128, 8
    $region9: #{tpu_custom_call.1} parent=1 // pred_fallthru
      _
    // Predicated region
    $region10: #{tpu_custom_call.1} parent=1 // pred_check
      _
    $region11: #{tpu_custom_call.1} parent=1 // pred_check_branch
      %35 = sbr.rel (0) target = $region13
    $region12: #{tpu_custom_call.1} parent=1 // pred_region
      %36 = dma.done [#allocation3], 512
    $region13: #{tpu_custom_call.1} parent=1 // pred_fallthru
      _
    // Predicated region
    $region14: #{tpu_custom_call.1} parent=1 // pred_check
      _
    $region15: #{tpu_custom_call.1} parent=1 // pred_check_branch
      %38 = sbr.rel (0) target = $region17
    $region16: #{tpu_custom_call.1} parent=1 // pred_region
      %39 = dma.done [#allocation6], 512
    $region17: #{tpu_custom_call.1} parent=1 // pred_fallthru
      _
    %v40 = vld [vmem:[#allocation2] sm:$0xff]
    %v41 = vld [vmem:[#allocation2 + $0x8] sm:$0xff]
    %v42 = vld [vmem:[#allocation2 + $0x10] sm:$0xff]
    %v43 = vld [vmem:[#allocation2 + $0x18] sm:$0xff]
    %v44 = vld [vmem:[#allocation5] sm:$0xff]
    %v45 = vld [vmem:[#allocation5 + $0x8] sm:$0xff]
    %v46 = vld [vmem:[#allocation5 + $0x10] sm:$0xff]
    %v47 = vld [vmem:[#allocation5 + $0x18] sm:$0xff]
    %v48 = vsub.f32 %v40, %v44
    %v49 = vsub.f32 %v41, %v45
    %v50 = vsub.f32 %v42, %v46
    %v51 = vsub.f32 %v43, %v47
    %v52 = vmul.f32 %v48, %v48
    %v53 = vmul.f32 %v49, %v49
    %v54 = vmul.f32 %v50, %v50
    %v55 = vmul.f32 %v51, %v51
    %v56 = vadd.f32 %v52, %v53
    %v57 = vadd.f32 %v56, %v54
    %v58 = vadd.f32 %v57, %v55
    %59 = vst [vmem:[#allocation7] sm:$0xff] %v58
    // Predicated region
    $region18: #{tpu_custom_call.1} parent=1 // pred_check
      _
    $region19: #{tpu_custom_call.1} parent=1 // pred_check_branch
      %61 = sbr.rel (0) target = $region21
    $region20: #{tpu_custom_call.1} parent=1 // pred_region
      %s63 = ssub.s32 128, 128
      %64 = vsyncadd [#allocation4], %s63
      %s66 = sshll.u32 [#allocation7], 4
      %s67 = int_to_ptr.vmem [resolvable:$true] %s66
      %69 = dma.vmem_to_hbm [thread:$0]  %s67, 128, %s2, [#allocation4]
    $region21: #{tpu_custom_call.1} parent=1 // pred_fallthru
      _
    // Predicated region
    $region22: #{tpu_custom_call.1} parent=1 // pred_check
      _
    $region23: #{tpu_custom_call.1} parent=1 // pred_check_branch
      %71 = sbr.rel (0) target = $region25
    $region24: #{tpu_custom_call.1} parent=1 // pred_region
      %72 = dma.done [#allocation4], 128
    $region25: #{tpu_custom_call.1} parent=1 // pred_fallthru
      _
    %73 = vsyncpa [#allocation3], 1
    %74 = vsyncpa [#allocation6], 1
    %75 = vsyncpa [#allocation4], 1

</llo_original>
